<compile_context>
chip_gen: v7x
topology: tpu7x:2x2x1
jax: 0.10.0
libtpu: 0.0.40
codegen_flags: <defaults>
</compile_context>

<pallas_src>
import functools

import jax
import jax.numpy as jnp
import numpy as np
from jax.experimental import pallas as pl
from jax.experimental.pallas import tpu as pltpu

LANE = 128     # TPU lane width
SUBLANE = 8    # TPU sublane width (f32)


def _round_up(x, m):
    return ((x + m - 1) // m) * m


def _slab_layout():
    """Row layout of the packed [R, 128] parameter slab (all offsets multiples of 8)."""
    names_rows = (
        ("w1", 2 * LANE),   # fused [[wl1];[wr1]]  for cat([agg, z], -1) @ W   (K = 256)
        ("b1", SUBLANE),    # bl1 in row 0
        ("w2", 2 * LANE),   # fused [[wl2];[wr2]]
        ("b2", SUBLANE),    # bl2 in row 0
        ("wh1s", LANE),     # wh1[:D, :]  (src half of the concat head input)
        ("wh1d", LANE),     # wh1[D:, :]  (dst half)
        ("bh1", SUBLANE),   # bh1 in row 0
        ("wh2t", SUBLANE),  # wh2^T in row 0 (dim_out == 1)
        ("bh2", SUBLANE),   # bh2 scalar at [0, 0]
    )
    layout, off = {}, 0
    for name, rows in names_rows:
        layout[name] = (off, rows)
        off += rows
    return layout, off


def pack_graph_head_params(params, *, embed_dim, dim_out):
    """One-time host-side packing of every weight/bias into one lane-dense f32 slab."""
    assert dim_out == 1, "final projection is specialized for dim_out == 1 (binary prediction)"
    d = embed_dim
    layout, total_rows = _slab_layout()
    slab = np.zeros((total_rows, LANE), np.float32)

    def put(name, mat, row_off=0):
        r0, _ = layout[name]
        mat = np.asarray(mat, np.float32)
        slab[r0 + row_off: r0 + row_off + mat.shape[0], : mat.shape[1]] = mat

    # SAGEConv weights, fused for the concat([agg, z]) matmul (agg/z are lane-padded to 128).
    put("w1", params["wl1"], row_off=0)
    put("w1", params["wr1"], row_off=LANE)
    put("w2", params["wl2"], row_off=0)
    put("w2", params["wr2"], row_off=LANE)
    put("b1", params["bl1"])
    put("b2", params["bl2"])
    # Head MLP layer 1, split into src/dst halves (concat realized as split matmul).
    put("wh1s", params["wh1"][:d])
    put("wh1d", params["wh1"][d:])
    put("bh1", params["bh1"])
    # Head MLP layer 2 (dim_out == 1): stored transposed as a single 128-lane row.
    put("wh2t", np.asarray(params["wh2"], np.float32).T)
    put("bh2", params["bh2"])
    return jnp.asarray(slab)


def _graph_head_kernel(a_ref, z_ref, p_ref, out_ref, *, layout, batch_size, b_pad):
    """Whole GraphHead forward on one TensorCore (shapes are tiny; single program).

    a_ref   : [N_pad, N_pad] row-normalized dense adjacency (mean aggregation)
    z_ref   : [N_pad, 128]   node embeddings, lane-padded (cols >= D are zero)
    p_ref   : [R, 128]       packed parameter slab (see _slab_layout)
    out_ref : [b_pad, 128]   lane-dense output; column 0 holds the prediction
    """
    a = a_ref[...]
    z = z_ref[...]

    def p(name):
        off, rows = layout[name]
        return p_ref[off:off + rows, :]          # static, sublane-aligned slice

    def sage_layer(z, w, b_row):
        # SAGEConv(normalize=True): lin_l(mean_agg(z)) + lin_r(z), row-wise L2 norm, ReLU.
        agg = jnp.dot(a, z, preferred_element_type=jnp.float32)
        cat = jnp.concatenate([agg, z], axis=-1)                       # [N_pad, 256]
        h = jnp.dot(cat, w, preferred_element_type=jnp.float32) + b_row
        # F.normalize(p=2, eps=1e-12)  ==  h * rsqrt(max(sum h^2, 1e-24))  (rsqrt -> EUP slot)
        sumsq = jnp.sum(h * h, axis=-1, keepdims=True)
        h = h * jax.lax.rsqrt(jnp.maximum(sumsq, 1e-24))
        return jnp.maximum(h, 0.0)                                     # ReLU (dropout = 0.0)

    z = sage_layer(z, p("w1"), p("b1")[0:1, :])
    z = sage_layer(z, p("w2"), p("b2")[0:1, :])

    # Gather src rows [0:B) and dst rows [B:2B) with a tiny in-kernel selection matmul so
    # every row slice below stays sublane(8)-aligned even when B is not a multiple of 8.
    n_pad = a.shape[0]
    ri = jax.lax.broadcasted_iota(jnp.int32, (2 * b_pad, n_pad), 0)
    ci = jax.lax.broadcasted_iota(jnp.int32, (2 * b_pad, n_pad), 1)
    tgt = jnp.where(ri < b_pad, ri, ri - b_pad + batch_size)
    sel = jnp.where(ci == tgt, 1.0, 0.0)
    sz = jnp.dot(sel, z, preferred_element_type=jnp.float32)           # [2*b_pad, 128]

    # Head MLP layer 1: concat(src, dst) @ wh1 realized as split matmul over the two halves.
    h1 = (jnp.dot(sz[:b_pad, :], p("wh1s"), preferred_element_type=jnp.float32)
          + jnp.dot(sz[b_pad:, :], p("wh1d"), preferred_element_type=jnp.float32)
          + p("bh1")[0:1, :])
    h1 = jnp.maximum(h1, 0.0)

    # Head MLP layer 2 (dim_out == 1): VPU multiply + lane reduction (no 1-lane MXU drain);
    # broadcast so the store is a full 128-lane unmasked vst.
    w2_row = p("wh2t")[0:1, :]                                         # [1, 128]
    bias2 = p("bh2")[0:1, 0:1]                                         # [1, 1]
    val = jnp.sum(h1 * w2_row, axis=-1, keepdims=True) + bias2         # [b_pad, 1]
    out_ref[...] = jnp.broadcast_to(val, out_ref.shape)


def graph_head_forward(x_ids, edge_index, edge_label, node_emb, packed_params,
                       *, num_nodes, embed_dim, dim_out):
    """GraphHead.forward equivalent. Returns (pred, edge_label)."""
    assert dim_out == 1
    batch_size = int(edge_label.shape[0])
    b_pad = _round_up(batch_size, SUBLANE)
    n_pad = _round_up(num_nodes, SUBLANE)

    # ---- glue: node-id embedding lookup (batch.x[:, 0]), lane-padded to 128 columns ----
    z = node_emb[x_ids[:, 0]]                                            # [N, D]
    z0 = jnp.zeros((n_pad, LANE), jnp.float32).at[:num_nodes, :embed_dim].set(z)

    # ---- glue: dense mean-aggregation adjacency from edge_index (A[i, j] = 1/in_deg(i)) ----
    src, dst = edge_index[0], edge_index[1]
    a = jnp.zeros((n_pad, n_pad), jnp.float32).at[dst, src].add(1.0)
    a = a / jnp.maximum(a.sum(axis=1, keepdims=True), 1.0)

    layout, _ = _slab_layout()
    kernel = functools.partial(_graph_head_kernel, layout=layout,
                               batch_size=batch_size, b_pad=b_pad)
    vmem = pl.BlockSpec(memory_space=pltpu.MemorySpace.VMEM)

    # Single-program call, 3 input DMAs (A, z0, parameter slab), lane-dense padded output.
    # Note: for many independent subgraphs, add a leading grid axis over graphs with
    # dimension_semantics=("parallel",) so v7x shards work across its 2 TensorCores; for
    # large N, tile A over output rows (or switch to gather aggregation) to respect VMEM.
    out = pl.pallas_call(
        kernel,
        out_shape=jax.ShapeDtypeStruct((b_pad, LANE), jnp.float32),
        in_specs=[vmem, vmem, vmem],
        out_specs=vmem,
    )(a, z0, packed_params)

    pred = out[:batch_size, :dim_out]
    return pred, edge_label


def _reference_forward(x_ids, edge_index, edge_label, params, *, num_nodes, embed_dim):
    """Pure-JAX reference (faithful translation of the PyTorch module) for correctness."""
    z = params["node_emb"][x_ids[:, 0]]
    src, dst = edge_index[0], edge_index[1]
    a = jnp.zeros((num_nodes, num_nodes), jnp.float32).at[dst, src].add(1.0)
    a = a / jnp.maximum(a.sum(axis=1, keepdims=True), 1.0)
    for wl, bl, wr in ((params["wl1"], params["bl1"], params["wr1"]),
                       (params["wl2"], params["bl2"], params["wr2"])):
        h = a @ z @ wl + bl + z @ wr
        h = h / jnp.maximum(jnp.linalg.norm(h, axis=-1, keepdims=True), 1e-12)
        z = jax.nn.relu(h)
    b = edge_label.shape[0]
    graph_emb = jnp.concatenate([z[:b], z[b:2 * b]], axis=1)
    h1 = jax.nn.relu(graph_emb @ params["wh1"] + params["bh1"])
    return h1 @ params["wh2"] + params["bh2"]


if __name__ == "__main__":
    # Module config: hidden_dim=32 -> node_embed_dim = min(32, 64) = 32, num_layers=2,
    # num_head_layers=2, src_dst_agg='concat', dim_out=1, relu, no BN, no dropout.
    hidden_dim = 32
    embed_dim = min(hidden_dim, 64)      # 32
    dim_out = 1
    num_nodes = 16                       # N >= 2 * batch_size
    batch_size = 4
    num_edges = 40

    key = jax.random.PRNGKey(0)
    keys = jax.random.split(key, 16)

    # ---- deterministic synthetic parameters (shapes from __init__) ----
    s = 0.1
    params = {
        "node_emb": jax.random.normal(keys[0], (4, embed_dim), jnp.float32),            # Embedding(4, D)
        "wl1": s * jax.random.normal(keys[1], (embed_dim, embed_dim), jnp.float32),     # SAGEConv.lin_l
        "bl1": s * jax.random.normal(keys[2], (1, embed_dim), jnp.float32),
        "wr1": s * jax.random.normal(keys[3], (embed_dim, embed_dim), jnp.float32),     # SAGEConv.lin_r
        "wl2": s * jax.random.normal(keys[4], (embed_dim, embed_dim), jnp.float32),
        "bl2": s * jax.random.normal(keys[5], (1, embed_dim), jnp.float32),
        "wr2": s * jax.random.normal(keys[6], (embed_dim, embed_dim), jnp.float32),
        "wh1": s * jax.random.normal(keys[7], (2 * embed_dim, embed_dim), jnp.float32),  # MLP layer 1
        "bh1": s * jax.random.normal(keys[8], (1, embed_dim), jnp.float32),
        "wh2": s * jax.random.normal(keys[9], (embed_dim, dim_out), jnp.float32),        # MLP layer 2
        "bh2": s * jax.random.normal(keys[10], (1, dim_out), jnp.float32),
    }
    # Unused-in-forward edge_encoder Embedding(10, D) is intentionally omitted.

    # ---- deterministic synthetic "batch" ----
    x_ids = jax.random.randint(keys[11], (num_nodes, 2), 0, 4, jnp.int32)                 # batch.x
    edge_index = jax.random.randint(keys[12], (2, num_edges), 0, num_nodes, jnp.int32)    # batch.edge_index
    edge_label = jax.random.randint(keys[13], (batch_size,), 0, 2, jnp.int32)             # batch.edge_label

    # One-time host-side packing of all parameters into a single lane-dense slab.
    packed = pack_graph_head_params(params, embed_dim=embed_dim, dim_out=dim_out)

    pred, label_out = graph_head_forward(
        x_ids, edge_index, edge_label, params["node_emb"], packed,
        num_nodes=num_nodes, embed_dim=embed_dim, dim_out=dim_out)
    pred = jax.block_until_ready(pred)

    ref = _reference_forward(x_ids, edge_index, edge_label, params,
                             num_nodes=num_nodes, embed_dim=embed_dim)
    np.testing.assert_allclose(np.asarray(pred), np.asarray(ref), rtol=2e-4, atol=2e-5)
    assert pred.shape == (batch_size, dim_out)
    assert label_out.shape == (batch_size,)

    print("KERNEL_OK")
</pallas_src>

<mosaic_0001>
module attributes {stable_mosaic.version = 11 : i64} {
  func.func @_graph_head_kernel(%arg0: memref<16x16xf32, #tpu.memory_space<vmem>>, %arg1: memref<16x128xf32, #tpu.memory_space<vmem>>, %arg2: memref<808x128xf32, #tpu.memory_space<vmem>>, %arg3: memref<8x128xf32, #tpu.memory_space<vmem>>) attributes {dimension_semantics = [], scalar_prefetch = 0 : i64, scratch_operands = 0 : i64, tpu.core_type = #tpu.core_type<tc>} {
    %c0 = arith.constant 0 : index
    %c0_0 = arith.constant 0 : index
    %0 = vector.load %arg0[%c0, %c0_0] : memref<16x16xf32, #tpu.memory_space<vmem>>, vector<16x16xf32>
    %c0_1 = arith.constant 0 : index
    %c0_2 = arith.constant 0 : index
    %1 = vector.load %arg1[%c0_1, %c0_2] : memref<16x128xf32, #tpu.memory_space<vmem>>, vector<16x128xf32>
    %c0_3 = arith.constant 0 : index
    %c0_4 = arith.constant 0 : index
    %2 = vector.load %arg2[%c0_3, %c0_4] : memref<808x128xf32, #tpu.memory_space<vmem>>, vector<256x128xf32>
    %c256 = arith.constant 256 : index
    %c0_5 = arith.constant 0 : index
    %3 = vector.load %arg2[%c256, %c0_5] : memref<808x128xf32, #tpu.memory_space<vmem>>, vector<8x128xf32>
    %4 = vector.extract_strided_slice %3 {offsets = [0, 0], sizes = [1, 128], strides = [1, 1]} : vector<8x128xf32> to vector<1x128xf32>
    %cst = arith.constant dense<0.000000e+00> : vector<16x128xf32>
    %5 = tpu.matmul %0, %1, %cst {dimension_numbers = #tpu.dot_dimension_numbers<[1], [0], [0], [1], [0, 0, 1, 1], [], []>} : vector<16x16xf32>, vector<16x128xf32>, vector<16x128xf32> -> vector<16x128xf32>
    %6 = tpu.concatenate %5, %1 in 1 : vector<16x128xf32>, vector<16x128xf32> -> vector<16x256xf32>
    %cst_6 = arith.constant dense<0.000000e+00> : vector<16x128xf32>
    %7 = tpu.matmul %6, %2, %cst_6 {dimension_numbers = #tpu.dot_dimension_numbers<[1], [0], [0], [1], [0, 0, 1, 1], [], []>} : vector<16x256xf32>, vector<256x128xf32>, vector<16x128xf32> -> vector<16x128xf32>
    %8 = vector.broadcast %4 : vector<1x128xf32> to vector<16x128xf32>
    %9 = arith.addf %7, %8 : vector<16x128xf32>
    %10 = arith.mulf %9, %9 : vector<16x128xf32>
    %cst_7 = arith.constant dense<0.000000e+00> : vector<16xf32>
    %11 = vector.multi_reduction <add>, %10, %cst_7 [1] : vector<16x128xf32> to vector<16xf32>
    %12 = vector.shape_cast %11 : vector<16xf32> to vector<16x1xf32>
    %cst_8 = arith.constant 1.000000e-24 : f32
    %13 = vector.broadcast %cst_8 : f32 to vector<16x1xf32>
    %14 = arith.maximumf %12, %13 : vector<16x1xf32>
    %15 = math.rsqrt %14 : vector<16x1xf32>
    %16 = vector.broadcast %15 : vector<16x1xf32> to vector<16x128xf32>
    %17 = arith.mulf %9, %16 : vector<16x128xf32>
    %cst_9 = arith.constant 0.000000e+00 : f32
    %18 = vector.broadcast %cst_9 : f32 to vector<16x128xf32>
    %19 = arith.maximumf %17, %18 : vector<16x128xf32>
    %c264 = arith.constant 264 : index
    %c0_10 = arith.constant 0 : index
    %20 = vector.load %arg2[%c264, %c0_10] : memref<808x128xf32, #tpu.memory_space<vmem>>, vector<256x128xf32>
    %c520 = arith.constant 520 : index
    %c0_11 = arith.constant 0 : index
    %21 = vector.load %arg2[%c520, %c0_11] : memref<808x128xf32, #tpu.memory_space<vmem>>, vector<8x128xf32>
    %22 = vector.extract_strided_slice %21 {offsets = [0, 0], sizes = [1, 128], strides = [1, 1]} : vector<8x128xf32> to vector<1x128xf32>
    %cst_12 = arith.constant dense<0.000000e+00> : vector<16x128xf32>
    %23 = tpu.matmul %0, %19, %cst_12 {dimension_numbers = #tpu.dot_dimension_numbers<[1], [0], [0], [1], [0, 0, 1, 1], [], []>} : vector<16x16xf32>, vector<16x128xf32>, vector<16x128xf32> -> vector<16x128xf32>
    %24 = tpu.concatenate %23, %19 in 1 : vector<16x128xf32>, vector<16x128xf32> -> vector<16x256xf32>
    %cst_13 = arith.constant dense<0.000000e+00> : vector<16x128xf32>
    %25 = tpu.matmul %24, %20, %cst_13 {dimension_numbers = #tpu.dot_dimension_numbers<[1], [0], [0], [1], [0, 0, 1, 1], [], []>} : vector<16x256xf32>, vector<256x128xf32>, vector<16x128xf32> -> vector<16x128xf32>
    %26 = vector.broadcast %22 : vector<1x128xf32> to vector<16x128xf32>
    %27 = arith.addf %25, %26 : vector<16x128xf32>
    %28 = arith.mulf %27, %27 : vector<16x128xf32>
    %cst_14 = arith.constant dense<0.000000e+00> : vector<16xf32>
    %29 = vector.multi_reduction <add>, %28, %cst_14 [1] : vector<16x128xf32> to vector<16xf32>
    %30 = vector.shape_cast %29 : vector<16xf32> to vector<16x1xf32>
    %cst_15 = arith.constant 1.000000e-24 : f32
    %31 = vector.broadcast %cst_15 : f32 to vector<16x1xf32>
    %32 = arith.maximumf %30, %31 : vector<16x1xf32>
    %33 = math.rsqrt %32 : vector<16x1xf32>
    %34 = vector.broadcast %33 : vector<16x1xf32> to vector<16x128xf32>
    %35 = arith.mulf %27, %34 : vector<16x128xf32>
    %cst_16 = arith.constant 0.000000e+00 : f32
    %36 = vector.broadcast %cst_16 : f32 to vector<16x128xf32>
    %37 = arith.maximumf %35, %36 : vector<16x128xf32>
    %38 = tpu.iota {dimensions = array<i32: 0>} : vector<16x16xi32>
    %39 = tpu.iota {dimensions = array<i32: 1>} : vector<16x16xi32>
    %c8_i32 = arith.constant 8 : i32
    %40 = vector.broadcast %c8_i32 : i32 to vector<16x16xi32>
    %41 = arith.cmpi slt, %38, %40 : vector<16x16xi32>
    %c8_i32_17 = arith.constant 8 : i32
    %42 = vector.broadcast %c8_i32_17 : i32 to vector<16x16xi32>
    %43 = arith.subi %38, %42 : vector<16x16xi32>
    %c4_i32 = arith.constant 4 : i32
    %44 = vector.broadcast %c4_i32 : i32 to vector<16x16xi32>
    %45 = arith.addi %43, %44 : vector<16x16xi32>
    %46 = arith.select %41, %38, %45 : vector<16x16xi1>, vector<16x16xi32>
    %47 = arith.cmpi eq, %39, %46 : vector<16x16xi32>
    %cst_18 = arith.constant 1.000000e+00 : f32
    %cst_19 = arith.constant 0.000000e+00 : f32
    %48 = vector.broadcast %cst_18 : f32 to vector<16x16xf32>
    %49 = vector.broadcast %cst_19 : f32 to vector<16x16xf32>
    %50 = arith.select %47, %48, %49 : vector<16x16xi1>, vector<16x16xf32>
    %cst_20 = arith.constant dense<0.000000e+00> : vector<16x128xf32>
    %51 = tpu.matmul %50, %37, %cst_20 {dimension_numbers = #tpu.dot_dimension_numbers<[1], [0], [0], [1], [0, 0, 1, 1], [], []>} : vector<16x16xf32>, vector<16x128xf32>, vector<16x128xf32> -> vector<16x128xf32>
    %52 = vector.extract_strided_slice %51 {offsets = [0, 0], sizes = [8, 128], strides = [1, 1]} : vector<16x128xf32> to vector<8x128xf32>
    %c528 = arith.constant 528 : index
    %c0_21 = arith.constant 0 : index
    %53 = vector.load %arg2[%c528, %c0_21] : memref<808x128xf32, #tpu.memory_space<vmem>>, vector<128x128xf32>
    %cst_22 = arith.constant dense<0.000000e+00> : vector<8x128xf32>
    %54 = tpu.matmul %52, %53, %cst_22 {dimension_numbers = #tpu.dot_dimension_numbers<[1], [0], [0], [1], [0, 0, 1, 1], [], []>} : vector<8x128xf32>, vector<128x128xf32>, vector<8x128xf32> -> vector<8x128xf32>
    %55 = vector.extract_strided_slice %51 {offsets = [8, 0], sizes = [8, 128], strides = [1, 1]} : vector<16x128xf32> to vector<8x128xf32>
    %c656 = arith.constant 656 : index
    %c0_23 = arith.constant 0 : index
    %56 = vector.load %arg2[%c656, %c0_23] : memref<808x128xf32, #tpu.memory_space<vmem>>, vector<128x128xf32>
    %cst_24 = arith.constant dense<0.000000e+00> : vector<8x128xf32>
    %57 = tpu.matmul %55, %56, %cst_24 {dimension_numbers = #tpu.dot_dimension_numbers<[1], [0], [0], [1], [0, 0, 1, 1], [], []>} : vector<8x128xf32>, vector<128x128xf32>, vector<8x128xf32> -> vector<8x128xf32>
    %58 = arith.addf %54, %57 : vector<8x128xf32>
    %c784 = arith.constant 784 : index
    %c0_25 = arith.constant 0 : index
    %59 = vector.load %arg2[%c784, %c0_25] : memref<808x128xf32, #tpu.memory_space<vmem>>, vector<8x128xf32>
    %60 = vector.extract_strided_slice %59 {offsets = [0, 0], sizes = [1, 128], strides = [1, 1]} : vector<8x128xf32> to vector<1x128xf32>
    %61 = vector.broadcast %60 : vector<1x128xf32> to vector<8x128xf32>
    %62 = arith.addf %58, %61 : vector<8x128xf32>
    %cst_26 = arith.constant 0.000000e+00 : f32
    %63 = vector.broadcast %cst_26 : f32 to vector<8x128xf32>
    %64 = arith.maximumf %62, %63 : vector<8x128xf32>
    %c792 = arith.constant 792 : index
    %c0_27 = arith.constant 0 : index
    %65 = vector.load %arg2[%c792, %c0_27] : memref<808x128xf32, #tpu.memory_space<vmem>>, vector<8x128xf32>
    %66 = vector.extract_strided_slice %65 {offsets = [0, 0], sizes = [1, 128], strides = [1, 1]} : vector<8x128xf32> to vector<1x128xf32>
    %c800 = arith.constant 800 : index
    %c0_28 = arith.constant 0 : index
    %67 = vector.load %arg2[%c800, %c0_28] : memref<808x128xf32, #tpu.memory_space<vmem>>, vector<8x128xf32>
    %68 = vector.extract_strided_slice %67 {offsets = [0, 0], sizes = [1, 1], strides = [1, 1]} : vector<8x128xf32> to vector<1x1xf32>
    %69 = vector.broadcast %66 : vector<1x128xf32> to vector<8x128xf32>
    %70 = arith.mulf %64, %69 : vector<8x128xf32>
    %cst_29 = arith.constant dense<0.000000e+00> : vector<8xf32>
    %71 = vector.multi_reduction <add>, %70, %cst_29 [1] : vector<8x128xf32> to vector<8xf32>
    %72 = vector.shape_cast %71 : vector<8xf32> to vector<8x1xf32>
    %73 = vector.broadcast %68 : vector<1x1xf32> to vector<8x1xf32>
    %74 = arith.addf %72, %73 : vector<8x1xf32>
    %75 = vector.shape_cast %74 : vector<8x1xf32> to vector<8x1xf32>
    %76 = vector.broadcast %75 : vector<8x1xf32> to vector<8x128xf32>
    %c0_30 = arith.constant 0 : index
    %c0_31 = arith.constant 0 : index
    %77 = vector.load %arg3[%c0_30, %c0_31] : memref<8x128xf32, #tpu.memory_space<vmem>>, vector<8x128xf32>
    tpu.vector_store %arg3[%c0_30, %c0_31], %76 {strides = array<i32>} : memref<8x128xf32, #tpu.memory_space<vmem>>, vector<8x128xf32>,
    return
  }
}

</mosaic_0001>

<llo_original>
// kernel: tpu_custom_call.1
$region0: #{tpu_custom_call.1}
  #allocation0 [shape = 'u32[]', space=smem, size = 0x4, offset = 0x4, fixed_abs, tag = 'smem constant byte address 0x4 - core index']
  #allocation1 [shape = 'u32[144,128]{1,0:T(1,128)}', space=vmem, size = 0x12000, scoped, tag = 'internal scratch']
  %s0 = inlined_call_operand.hbm [shape: f32[16,16], index: 0, kind: input, shape index: {}]
  %s1 = inlined_call_operand.hbm [shape: f32[16,128], index: 1, kind: input, shape index: {}]
  %s2 = inlined_call_operand.hbm [shape: f32[808,128], index: 2, kind: input, shape index: {}]
  %s3 = inlined_call_operand.hbm [shape: f32[8,128], index: 3, kind: output, shape index: {}]
  %s4 = sld [smem:[#allocation0]]
  $region34: #{tpu_custom_call.1} parent=0
    _
  %s6 = ssub.s32 1, %s4
  %s7 = scalar_select 0, %s6, %s4
  $region1: #{tpu_custom_call.1} parent=0
    #allocation2 [shape = 'u8[8192]{0}', space=vmem, size = 0x2000, scoped, tag = 'input window, operand 0, single buffered']
    #allocation3 [shape = 's32[1]{0}', space=sflag, size = 0x4, scoped, tag = 'scoped memory for tpu_custom_call.1']
    #allocation4 [shape = 's32[1]{0}', space=sflag, size = 0x4, scoped, tag = 'scoped memory for tpu_custom_call.1']
    #allocation5 [shape = 'u8[8192]{0}', space=vmem, size = 0x2000, scoped, tag = 'input window, operand 1, single buffered']
    #allocation6 [shape = 's32[1]{0}', space=sflag, size = 0x4, scoped, tag = 'scoped memory for tpu_custom_call.1']
    #allocation7 [shape = 'u8[413696]{0}', space=vmem, size = 0x65000, scoped, tag = 'input window, operand 2, single buffered']
    #allocation8 [shape = 'u8[4096]{0}', space=vmem, size = 0x1000, scoped, tag = 'output window, operand 0, single buffered']
    %8 = vsyncpa [#allocation3], 0
    %9 = vsyncpa [#allocation6], 0
    %10 = vsyncpa [#allocation4], 0
    // Predicated region
    $region2: #{tpu_custom_call.1} parent=1 // pred_check
      _
    $region3: #{tpu_custom_call.1} parent=1 // pred_check_branch
      %12 = sbr.rel (0) target = $region5
    $region4: #{tpu_custom_call.1} parent=1 // pred_region
      %s14 = ssub.s32 256, 256
      %15 = vsyncadd [#allocation3], %s14
      %s16 = sshll.u32 [#allocation2], 4
      %s17 = int_to_ptr.vmem [resolvable:$true] %s16
      %22 = dma.hbm_to_vmem [thread:$0]  %s0, 256, %s17, [#allocation3], 128, 128, 8
    $region5: #{tpu_custom_call.1} parent=1 // pred_fallthru
      _
    // Predicated region
    $region6: #{tpu_custom_call.1} parent=1 // pred_check
      _
    $region7: #{tpu_custom_call.1} parent=1 // pred_check_branch
      %24 = sbr.rel (0) target = $region9
    $region8: #{tpu_custom_call.1} parent=1 // pred_region
      %s26 = ssub.s32 256, 256
      %27 = vsyncadd [#allocation6], %s26
      %s28 = sshll.u32 [#allocation5], 4
      %s29 = int_to_ptr.vmem [resolvable:$true] %s28
      %34 = dma.hbm_to_vmem [thread:$0]  %s1, 256, %s29, [#allocation6], 128, 128, 8
    $region9: #{tpu_custom_call.1} parent=1 // pred_fallthru
      _
    // Predicated region
    $region10: #{tpu_custom_call.1} parent=1 // pred_check
      _
    $region11: #{tpu_custom_call.1} parent=1 // pred_check_branch
      %36 = sbr.rel (0) target = $region13
    $region12: #{tpu_custom_call.1} parent=1 // pred_region
      %s38 = ssub.s32 12928, 12928
      %39 = vsyncadd [#allocation6], %s38
      %s40 = sshll.u32 [#allocation7], 4
      %s41 = int_to_ptr.vmem [resolvable:$true] %s40
      %46 = dma.hbm_to_vmem [thread:$0]  %s2, 12928, %s41, [#allocation6], 128, 128, 8
    $region13: #{tpu_custom_call.1} parent=1 // pred_fallthru
      _
    // Predicated region
    $region14: #{tpu_custom_call.1} parent=1 // pred_check
      _
    $region15: #{tpu_custom_call.1} parent=1 // pred_check_branch
      %48 = sbr.rel (0) target = $region17
    $region16: #{tpu_custom_call.1} parent=1 // pred_region
      %49 = dma.done [#allocation3], 256
    $region17: #{tpu_custom_call.1} parent=1 // pred_fallthru
      _
    // Predicated region
    $region18: #{tpu_custom_call.1} parent=1 // pred_check
      _
    $region19: #{tpu_custom_call.1} parent=1 // pred_check_branch
      %51 = sbr.rel (0) target = $region21
    $region20: #{tpu_custom_call.1} parent=1 // pred_region
      %52 = dma.done [#allocation6], 256
    $region21: #{tpu_custom_call.1} parent=1 // pred_fallthru
      _
    // Predicated region
    $region22: #{tpu_custom_call.1} parent=1 // pred_check
      _
    $region23: #{tpu_custom_call.1} parent=1 // pred_check_branch
      %54 = sbr.rel (0) target = $region25
    $region24: #{tpu_custom_call.1} parent=1 // pred_region
      %55 = dma.done [#allocation6], 12928
    $region25: #{tpu_custom_call.1} parent=1 // pred_fallthru
      _
    %v56 = vld [vmem:[#allocation2] sm:$0xff]
    %v57 = vld [vmem:[#allocation2 + $0x8] sm:$0xff]
    %v58 = vld [vmem:[#allocation5] sm:$0xff]
    %v59 = vld [vmem:[#allocation5 + $0x8] sm:$0xff]
    %v60 = vld [vmem:[#allocation7] sm:$0xff]
    %v61 = vld [vmem:[#allocation7 + $0x8] sm:$0xff]
    %v62 = vld [vmem:[#allocation7 + $0x10] sm:$0xff]
    %v63 = vld [vmem:[#allocation7 + $0x18] sm:$0xff]
    %v64 = vld [vmem:[#allocation7 + $0x20] sm:$0xff]
    %v65 = vld [vmem:[#allocation7 + $0x28] sm:$0xff]
    %v66 = vld [vmem:[#allocation7 + $0x30] sm:$0xff]
    %v67 = vld [vmem:[#allocation7 + $0x38] sm:$0xff]
    %v68 = vld [vmem:[#allocation7 + $0x40] sm:$0xff]
    %v69 = vld [vmem:[#allocation7 + $0x48] sm:$0xff]
    %v70 = vld [vmem:[#allocation7 + $0x50] sm:$0xff]
    %v71 = vld [vmem:[#allocation7 + $0x58] sm:$0xff]
    %v72 = vld [vmem:[#allocation7 + $0x60] sm:$0xff]
    %v73 = vld [vmem:[#allocation7 + $0x68] sm:$0xff]
    %v74 = vld [vmem:[#allocation7 + $0x70] sm:$0xff]
    %v75 = vld [vmem:[#allocation7 + $0x78] sm:$0xff]
    %v76 = vld [vmem:[#allocation7 + $0x80] sm:$0xff]
    %v77 = vld [vmem:[#allocation7 + $0x88] sm:$0xff]
    %v78 = vld [vmem:[#allocation7 + $0x90] sm:$0xff]
    %v79 = vld [vmem:[#allocation7 + $0x98] sm:$0xff]
    %v80 = vld [vmem:[#allocation7 + $0xa0] sm:$0xff]
    %v81 = vld [vmem:[#allocation7 + $0xa8] sm:$0xff]
    %v82 = vld [vmem:[#allocation7 + $0xb0] sm:$0xff]
    %v83 = vld [vmem:[#allocation7 + $0xb8] sm:$0xff]
    %v84 = vld [vmem:[#allocation7 + $0xc0] sm:$0xff]
    %v85 = vld [vmem:[#allocation7 + $0xc8] sm:$0xff]
    %v86 = vld [vmem:[#allocation7 + $0xd0] sm:$0xff]
    %v87 = vld [vmem:[#allocation7 + $0xd8] sm:$0xff]
    %v88 = vld [vmem:[#allocation7 + $0xe0] sm:$0xff]
    %v89 = vld [vmem:[#allocation7 + $0xe8] sm:$0xff]
    %v90 = vld [vmem:[#allocation7 + $0xf0] sm:$0xff]
    %v91 = vld [vmem:[#allocation7 + $0xf8] sm:$0xff]
    %v92 = vld [vmem:[#allocation7 + $0x100] sm:$0xff]
    %vm93 = vcmask 130048
    %v95 = vsel %vm93, %v56, 0
    %v98 = vsel %vm93, %v57, 0
    %100 = vmatprep.subr.mxu0 0.0
    %101 = vmatpush1.msra.mxu0 %v58
    %102 = vmatprep.subr.mxu0 0.0
    %103 = vmatpush1.msra.mxu0 %v59
    %104 = vmatprep.subr.mxu0 0.0
    %105 = vmatpush1.msra.mxu0 0.0
    %106 = vmatprep.subr.mxu0 0.0
    %107 = vmatpush1.msra.mxu0 0.0
    %108 = vmatprep.subr.mxu0 0.0
    %109 = vmatpush1.msra.mxu0 0.0
    %110 = vmatprep.subr.mxu0 0.0
    %111 = vmatpush1.msra.mxu0 0.0
    %112 = vmatprep.subr.mxu0 0.0
    %113 = vmatpush1.msra.mxu0 0.0
    %114 = vmatprep.subr.mxu0 0.0
    %115 = vmatpush1.msra.mxu0 0.0
    %116 = vmatprep.subr.mxu0 0.0
    %117 = vmatpush1.msra.mxu0 0.0
    %118 = vmatprep.subr.mxu0 0.0
    %119 = vmatpush1.msra.mxu0 0.0
    %120 = vmatprep.subr.mxu0 0.0
    %121 = vmatpush1.msra.mxu0 0.0
    %122 = vmatprep.subr.mxu0 0.0
    %123 = vmatpush1.msra.mxu0 0.0
    %124 = vmatprep.subr.mxu0 0.0
    %125 = vmatpush1.msra.mxu0 0.0
    %126 = vmatprep.subr.mxu0 0.0
    %127 = vmatpush1.msra.mxu0 0.0
    %128 = vmatprep.subr.mxu0 0.0
    %129 = vmatpush1.msra.mxu0 0.0
    %130 = vmatprep.subr.mxu0 0.0
    %131 = vmatpush1.msra.mxu0 0.0
    %132 = vmatprep.subr.mxu0 0.0
    %133 = vmatpush1.msra.mxu0 0.0
    %134 = vmatprep.subr.mxu0 0.0
    %135 = vmatpush1.msra.mxu0 0.0
    %136 = vmatprep.subr.mxu0 0.0
    %137 = vmatpush1.msra.mxu0 0.0
    %138 = vmatprep.subr.mxu0 0.0
    %139 = vmatpush1.msra.mxu0 0.0
    %140 = vmatprep.subr.mxu0 0.0
    %141 = vmatpush1.msra.mxu0 0.0
    %142 = vmatprep.subr.mxu0 0.0
    %143 = vmatpush1.msra.mxu0 0.0
    %144 = vmatprep.subr.mxu0 0.0
    %145 = vmatpush1.msra.mxu0 0.0
    %146 = vmatprep.subr.mxu0 0.0
    %147 = vmatpush1.msra.mxu0 0.0
    %148 = vmatprep.subr.mxu0 0.0
    %149 = vmatpush1.msra.mxu0 0.0
    %150 = vmatprep.subr.mxu0 0.0
    %151 = vmatpush1.msra.mxu0 0.0
    %152 = vmatprep.subr.mxu0 0.0
    %153 = vmatpush1.msra.mxu0 0.0
    %154 = vmatprep.subr.mxu0 0.0
    %155 = vmatpush1.msra.mxu0 0.0
    %156 = vmatprep.subr.mxu0 0.0
    %157 = vmatpush1.msra.mxu0 0.0
    %158 = vmatprep.subr.mxu0 0.0
    %159 = vmatpush1.msra.mxu0 0.0
    %160 = vmatprep.subr.mxu0 0.0
    %161 = vmatpush1.msra.mxu0 0.0
    %162 = vmatprep.subr.mxu0 0.0
    %163 = vmatpush1.msra.mxu0 0.0
    %164 = vmatprep.mubr.f32.mxu0 0.0
    %165 = vmatmul.mubr.f32.gmra.mrb[0].mxu0 %v95
    %v166 = vpop.f32.mrb[0].mxu0
    %v167 = vadd.f32 0.0, %v166
    %v168 = vpop.f32.mrb[0].mxu0
    %169 = vmatprep.mubr.f32.mxu0 0.0
    %170 = vmatmul.mubr.f32.gmra.mrb[0].mxu0 %v98
    %v171 = vpop.f32.mrb[0].mxu0
    %v172 = vadd.f32 0.0, %v171
    %v173 = vpop.f32.mrb[0].mxu0
    %174 = vdwg.mxu0
    %v175 = vlaneseq
    %v176 = vshrl.u32 %v175, 7
    %v177 = vsub.s32 0, %v176
    %v178 = vrot.slane %v92, %v177
    %179 = vmatprep.subr.mxu0 0.0
    %180 = vmatpush1.msra.mxu0 %v60
    %181 = vmatprep.subr.mxu0 0.0
    %182 = vmatpush1.msra.mxu0 %v61
    %183 = vmatprep.subr.mxu0 0.0
    %184 = vmatpush1.msra.mxu0 %v62
    %185 = vmatprep.subr.mxu0 0.0
    %186 = vmatpush1.msra.mxu0 %v63
    %187 = vmatprep.subr.mxu0 0.0
    %188 = vmatpush1.msra.mxu0 %v64
    %189 = vmatprep.subr.mxu0 0.0
    %190 = vmatpush1.msra.mxu0 %v65
    %191 = vmatprep.subr.mxu0 0.0
    %192 = vmatpush1.msra.mxu0 %v66
    %193 = vmatprep.subr.mxu0 0.0
    %194 = vmatpush1.msra.mxu0 %v67
    %195 = vmatprep.subr.mxu0 0.0
    %196 = vmatpush1.msra.mxu0 %v68
    %197 = vmatprep.subr.mxu0 0.0
    %198 = vmatpush1.msra.mxu0 %v69
    %199 = vmatprep.subr.mxu0 0.0
    %200 = vmatpush1.msra.mxu0 %v70
    %201 = vmatprep.subr.mxu0 0.0
    %202 = vmatpush1.msra.mxu0 %v71
    %203 = vmatprep.subr.mxu0 0.0
    %204 = vmatpush1.msra.mxu0 %v72
    %205 = vmatprep.subr.mxu0 0.0
    %206 = vmatpush1.msra.mxu0 %v73
    %207 = vmatprep.subr.mxu0 0.0
    %208 = vmatpush1.msra.mxu0 %v74
    %209 = vmatprep.subr.mxu0 0.0
    %210 = vmatpush1.msra.mxu0 %v75
    %211 = vmatprep.subr.mxu0 0.0
    %212 = vmatpush1.msra.mxu0 %v76
    %213 = vmatprep.subr.mxu0 0.0
    %214 = vmatpush1.msra.mxu0 %v77
    %215 = vmatprep.subr.mxu0 0.0
    %216 = vmatpush1.msra.mxu0 %v78
    %217 = vmatprep.subr.mxu0 0.0
    %218 = vmatpush1.msra.mxu0 %v79
    %219 = vmatprep.subr.mxu0 0.0
    %220 = vmatpush1.msra.mxu0 %v80
    %221 = vmatprep.subr.mxu0 0.0
    %222 = vmatpush1.msra.mxu0 %v81
    %223 = vmatprep.subr.mxu0 0.0
    %224 = vmatpush1.msra.mxu0 %v82
    %225 = vmatprep.subr.mxu0 0.0
    %226 = vmatpush1.msra.mxu0 %v83
    %227 = vmatprep.subr.mxu0 0.0
    %228 = vmatpush1.msra.mxu0 %v84
    %229 = vmatprep.subr.mxu0 0.0
    %230 = vmatpush1.msra.mxu0 %v85
    %231 = vmatprep.subr.mxu0 0.0
    %232 = vmatpush1.msra.mxu0 %v86
    %233 = vmatprep.subr.mxu0 0.0
    %234 = vmatpush1.msra.mxu0 %v87
    %235 = vmatprep.subr.mxu0 0.0
    %236 = vmatpush1.msra.mxu0 %v88
    %237 = vmatprep.subr.mxu0 0.0
    %238 = vmatpush1.msra.mxu0 %v89
    %239 = vmatprep.subr.mxu0 0.0
    %240 = vmatpush1.msra.mxu0 %v90
    %241 = vmatprep.subr.mxu0 0.0
    %242 = vmatpush1.msra.mxu0 %v91
    %243 = vmatprep.mubr.f32.mxu0 %v58
    %244 = vmatmul.mubr.f32.gmra.mrb[0].mxu0 %v167
    %v245 = vpop.f32.mrb[0].mxu0
    %v246 = vadd.f32 %v178, %v245
    %v247 = vpop.f32.mrb[0].mxu0
    %248 = vmatprep.mubr.f32.mxu0 %v59
    %249 = vmatmul.mubr.f32.gmra.mrb[0].mxu0 %v172
    %v250 = vpop.f32.mrb[0].mxu0
    %v251 = vadd.f32 %v178, %v250
    %v252 = vpop.f32.mrb[0].mxu0
    %253 = vdwg.mxu0
    %v254 = vmul.f32 %v246, %v246
    %v255 = vmul.f32 %v251, %v251
    %256 = vadd.xlane.f32.xlu0 %v254
    %v257 = vpop.xlane.xlu0 %256
    %258 = vadd.xlane.f32.xlu0 %v255
    %v259 = vpop.xlane.xlu0 %258
    %v260 = vmax.f32 %v257, 1e-24
    %v261 = vmax.f32 %v259, 1e-24
    %v262 = vrsqrt.pop %v260
    %v263 = vrsqrt.pop %v261
    %v264 = vmul.f32 %v246, %v262
    %v265 = vmul.f32 %v251, %v263
    %v266 = vmax.f32 %v264, 0.0
    %v267 = vmax.f32 %v265, 0.0
    %v268 = vld [vmem:[#allocation7 + $0x108] sm:$0xff]
    %v269 = vld [vmem:[#allocation7 + $0x110] sm:$0xff]
    %v270 = vld [vmem:[#allocation7 + $0x118] sm:$0xff]
    %v271 = vld [vmem:[#allocation7 + $0x120] sm:$0xff]
    %v272 = vld [vmem:[#allocation7 + $0x128] sm:$0xff]
    %v273 = vld [vmem:[#allocation7 + $0x130] sm:$0xff]
    %v274 = vld [vmem:[#allocation7 + $0x138] sm:$0xff]
    %v275 = vld [vmem:[#allocation7 + $0x140] sm:$0xff]
    %v276 = vld [vmem:[#allocation7 + $0x148] sm:$0xff]
    %v277 = vld [vmem:[#allocation7 + $0x150] sm:$0xff]
    %v278 = vld [vmem:[#allocation7 + $0x158] sm:$0xff]
    %v279 = vld [vmem:[#allocation7 + $0x160] sm:$0xff]
    %v280 = vld [vmem:[#allocation7 + $0x168] sm:$0xff]
    %v281 = vld [vmem:[#allocation7 + $0x170] sm:$0xff]
    %v282 = vld [vmem:[#allocation7 + $0x178] sm:$0xff]
    %v283 = vld [vmem:[#allocation7 + $0x180] sm:$0xff]
    %v284 = vld [vmem:[#allocation7 + $0x188] sm:$0xff]
    %v285 = vld [vmem:[#allocation7 + $0x190] sm:$0xff]
    %v286 = vld [vmem:[#allocation7 + $0x198] sm:$0xff]
    %v287 = vld [vmem:[#allocation7 + $0x1a0] sm:$0xff]
    %v288 = vld [vmem:[#allocation7 + $0x1a8] sm:$0xff]
    %v289 = vld [vmem:[#allocation7 + $0x1b0] sm:$0xff]
    %v290 = vld [vmem:[#allocation7 + $0x1b8] sm:$0xff]
    %v291 = vld [vmem:[#allocation7 + $0x1c0] sm:$0xff]
    %v292 = vld [vmem:[#allocation7 + $0x1c8] sm:$0xff]
    %v293 = vld [vmem:[#allocation7 + $0x1d0] sm:$0xff]
    %v294 = vld [vmem:[#allocation7 + $0x1d8] sm:$0xff]
    %v295 = vld [vmem:[#allocation7 + $0x1e0] sm:$0xff]
    %v296 = vld [vmem:[#allocation7 + $0x1e8] sm:$0xff]
    %v297 = vld [vmem:[#allocation7 + $0x1f0] sm:$0xff]
    %v298 = vld [vmem:[#allocation7 + $0x1f8] sm:$0xff]
    %v299 = vld [vmem:[#allocation7 + $0x200] sm:$0xff]
    %v300 = vld [vmem:[#allocation7 + $0x208] sm:$0xff]
    %301 = vmatprep.subr.mxu0 0.0
    %302 = vmatpush1.msra.mxu0 %v266
    %303 = vmatprep.subr.mxu0 0.0
    %304 = vmatpush1.msra.mxu0 %v267
    %305 = vmatprep.subr.mxu0 0.0
    %306 = vmatpush1.msra.mxu0 0.0
    %307 = vmatprep.subr.mxu0 0.0
    %308 = vmatpush1.msra.mxu0 0.0
    %309 = vmatprep.subr.mxu0 0.0
    %310 = vmatpush1.msra.mxu0 0.0
    %311 = vmatprep.subr.mxu0 0.0
    %312 = vmatpush1.msra.mxu0 0.0
    %313 = vmatprep.subr.mxu0 0.0
    %314 = vmatpush1.msra.mxu0 0.0
    %315 = vmatprep.subr.mxu0 0.0
    %316 = vmatpush1.msra.mxu0 0.0
    %317 = vmatprep.subr.mxu0 0.0
    %318 = vmatpush1.msra.mxu0 0.0
    %319 = vmatprep.subr.mxu0 0.0
    %320 = vmatpush1.msra.mxu0 0.0
    %321 = vmatprep.subr.mxu0 0.0
    %322 = vmatpush1.msra.mxu0 0.0
    %323 = vmatprep.subr.mxu0 0.0
    %324 = vmatpush1.msra.mxu0 0.0
    %325 = vmatprep.subr.mxu0 0.0
    %326 = vmatpush1.msra.mxu0 0.0
    %327 = vmatprep.subr.mxu0 0.0
    %328 = vmatpush1.msra.mxu0 0.0
    %329 = vmatprep.subr.mxu0 0.0
    %330 = vmatpush1.msra.mxu0 0.0
    %331 = vmatprep.subr.mxu0 0.0
    %332 = vmatpush1.msra.mxu0 0.0
    %333 = vmatprep.subr.mxu0 0.0
    %334 = vmatpush1.msra.mxu0 0.0
    %335 = vmatprep.subr.mxu0 0.0
    %336 = vmatpush1.msra.mxu0 0.0
    %337 = vmatprep.subr.mxu0 0.0
    %338 = vmatpush1.msra.mxu0 0.0
    %339 = vmatprep.subr.mxu0 0.0
    %340 = vmatpush1.msra.mxu0 0.0
    %341 = vmatprep.subr.mxu0 0.0
    %342 = vmatpush1.msra.mxu0 0.0
    %343 = vmatprep.subr.mxu0 0.0
    %344 = vmatpush1.msra.mxu0 0.0
    %345 = vmatprep.subr.mxu0 0.0
    %346 = vmatpush1.msra.mxu0 0.0
    %347 = vmatprep.subr.mxu0 0.0
    %348 = vmatpush1.msra.mxu0 0.0
    %349 = vmatprep.subr.mxu0 0.0
    %350 = vmatpush1.msra.mxu0 0.0
    %351 = vmatprep.subr.mxu0 0.0
    %352 = vmatpush1.msra.mxu0 0.0
    %353 = vmatprep.subr.mxu0 0.0
    %354 = vmatpush1.msra.mxu0 0.0
    %355 = vmatprep.subr.mxu0 0.0
    %356 = vmatpush1.msra.mxu0 0.0
    %357 = vmatprep.subr.mxu0 0.0
    %358 = vmatpush1.msra.mxu0 0.0
    %359 = vmatprep.subr.mxu0 0.0
    %360 = vmatpush1.msra.mxu0 0.0
    %361 = vmatprep.subr.mxu0 0.0
    %362 = vmatpush1.msra.mxu0 0.0
    %363 = vmatprep.subr.mxu0 0.0
    %364 = vmatpush1.msra.mxu0 0.0
    %365 = vmatprep.mubr.f32.mxu0 0.0
    %366 = vmatmul.mubr.f32.gmra.mrb[0].mxu0 %v95
    %v367 = vpop.f32.mrb[0].mxu0
    %v368 = vadd.f32 0.0, %v367
    %v369 = vpop.f32.mrb[0].mxu0
    %370 = vmatprep.mubr.f32.mxu0 0.0
    %371 = vmatmul.mubr.f32.gmra.mrb[0].mxu0 %v98
    %v372 = vpop.f32.mrb[0].mxu0
    %v373 = vadd.f32 0.0, %v372
    %v374 = vpop.f32.mrb[0].mxu0
    %375 = vdwg.mxu0
    %v376 = vlaneseq
    %v377 = vshrl.u32 %v376, 7
    %v378 = vsub.s32 0, %v377
    %v379 = vrot.slane %v300, %v378
    %380 = vmatprep.subr.mxu0 0.0
    %381 = vmatpush1.msra.mxu0 %v268
    %382 = vmatprep.subr.mxu0 0.0
    %383 = vmatpush1.msra.mxu0 %v269
    %384 = vmatprep.subr.mxu0 0.0
    %385 = vmatpush1.msra.mxu0 %v270
    %386 = vmatprep.subr.mxu0 0.0
    %387 = vmatpush1.msra.mxu0 %v271
    %388 = vmatprep.subr.mxu0 0.0
    %389 = vmatpush1.msra.mxu0 %v272
    %390 = vmatprep.subr.mxu0 0.0
    %391 = vmatpush1.msra.mxu0 %v273
    %392 = vmatprep.subr.mxu0 0.0
    %393 = vmatpush1.msra.mxu0 %v274
    %394 = vmatprep.subr.mxu0 0.0
    %395 = vmatpush1.msra.mxu0 %v275
    %396 = vmatprep.subr.mxu0 0.0
    %397 = vmatpush1.msra.mxu0 %v276
    %398 = vmatprep.subr.mxu0 0.0
    %399 = vmatpush1.msra.mxu0 %v277
    %400 = vmatprep.subr.mxu0 0.0
    %401 = vmatpush1.msra.mxu0 %v278
    %402 = vmatprep.subr.mxu0 0.0
    %403 = vmatpush1.msra.mxu0 %v279
    %404 = vmatprep.subr.mxu0 0.0
    %405 = vmatpush1.msra.mxu0 %v280
    %406 = vmatprep.subr.mxu0 0.0
    %407 = vmatpush1.msra.mxu0 %v281
    %408 = vmatprep.subr.mxu0 0.0
    %409 = vmatpush1.msra.mxu0 %v282
    %410 = vmatprep.subr.mxu0 0.0
    %411 = vmatpush1.msra.mxu0 %v283
    %412 = vmatprep.subr.mxu0 0.0
    %413 = vmatpush1.msra.mxu0 %v284
    %414 = vmatprep.subr.mxu0 0.0
    %415 = vmatpush1.msra.mxu0 %v285
    %416 = vmatprep.subr.mxu0 0.0
    %417 = vmatpush1.msra.mxu0 %v286
    %418 = vmatprep.subr.mxu0 0.0
    %419 = vmatpush1.msra.mxu0 %v287
    %420 = vmatprep.subr.mxu0 0.0
    %421 = vmatpush1.msra.mxu0 %v288
    %422 = vmatprep.subr.mxu0 0.0
    %423 = vmatpush1.msra.mxu0 %v289
    %424 = vmatprep.subr.mxu0 0.0
    %425 = vmatpush1.msra.mxu0 %v290
    %426 = vmatprep.subr.mxu0 0.0
    %427 = vmatpush1.msra.mxu0 %v291
    %428 = vmatprep.subr.mxu0 0.0
    %429 = vmatpush1.msra.mxu0 %v292
    %430 = vmatprep.subr.mxu0 0.0
    %431 = vmatpush1.msra.mxu0 %v293
    %432 = vmatprep.subr.mxu0 0.0
    %433 = vmatpush1.msra.mxu0 %v294
    %434 = vmatprep.subr.mxu0 0.0
    %435 = vmatpush1.msra.mxu0 %v295
    %436 = vmatprep.subr.mxu0 0.0
    %437 = vmatpush1.msra.mxu0 %v296
    %438 = vmatprep.subr.mxu0 0.0
    %439 = vmatpush1.msra.mxu0 %v297
    %440 = vmatprep.subr.mxu0 0.0
    %441 = vmatpush1.msra.mxu0 %v298
    %442 = vmatprep.subr.mxu0 0.0
    %443 = vmatpush1.msra.mxu0 %v299
    %444 = vmatprep.mubr.f32.mxu0 %v266
    %445 = vmatmul.mubr.f32.gmra.mrb[0].mxu0 %v368
    %v446 = vpop.f32.mrb[0].mxu0
    %v447 = vadd.f32 %v379, %v446
    %v448 = vpop.f32.mrb[0].mxu0
    %449 = vmatprep.mubr.f32.mxu0 %v267
    %450 = vmatmul.mubr.f32.gmra.mrb[0].mxu0 %v373
    %v451 = vpop.f32.mrb[0].mxu0
    %v452 = vadd.f32 %v379, %v451
    %v453 = vpop.f32.mrb[0].mxu0
    %454 = vdwg.mxu0
    %v455 = vmul.f32 %v447, %v447
    %v456 = vmul.f32 %v452, %v452
    %457 = vadd.xlane.f32.xlu0 %v455
    %v458 = vpop.xlane.xlu0 %457
    %459 = vadd.xlane.f32.xlu0 %v456
    %v460 = vpop.xlane.xlu0 %459
    %v461 = vmax.f32 %v458, 1e-24
    %v462 = vmax.f32 %v460, 1e-24
    %v463 = vrsqrt.pop %v461
    %v464 = vrsqrt.pop %v462
    %v465 = vmul.f32 %v447, %v463
    %v466 = vmul.f32 %v452, %v464
    %v467 = vmax.f32 %v465, 0.0
    %v468 = vmax.f32 %v466, 0.0
    %v469 = vlaneseq
    %v470 = vshrl.u32 %v469, 7
    %v471 = vadd.s32 %v470, 8
    %v472 = vlaneseq
    %v473 = vand.u32 %v472, 127
    %vm474 = vcmp.lt.s32.totalorder %v470, 8
    %vm475 = vcmp.lt.s32.totalorder %v471, 8
    %v476 = vsub.s32 %v470, 8
    %v477 = vadd.s32 %v476, 4
    %v478 = vadd.s32 %v470, 4
    %v479 = vsel %vm474, %v470, %v477
    %v480 = vsel %vm475, %v471, %v478
    %vm481 = vcmp.eq.s32.totalorder %v473, %v479
    %vm482 = vcmp.eq.s32.totalorder %v473, %v480
    %v483 = vsel %vm481, 1.0, 0.0
    %v484 = vsel %vm482, 1.0, 0.0
    %v486 = vsel %vm93, %v483, 0
    %v489 = vsel %vm93, %v484, 0
    %491 = vmatprep.subr.mxu0 0.0
    %492 = vmatpush1.msra.mxu0 %v467
    %493 = vmatprep.subr.mxu0 0.0
    %494 = vmatpush1.msra.mxu0 %v468
    %495 = vmatprep.subr.mxu0 0.0
    %496 = vmatpush1.msra.mxu0 0.0
    %497 = vmatprep.subr.mxu0 0.0
    %498 = vmatpush1.msra.mxu0 0.0
    %499 = vmatprep.subr.mxu0 0.0
    %500 = vmatpush1.msra.mxu0 0.0
    %501 = vmatprep.subr.mxu0 0.0
    %502 = vmatpush1.msra.mxu0 0.0
    %503 = vmatprep.subr.mxu0 0.0
    %504 = vmatpush1.msra.mxu0 0.0
    %505 = vmatprep.subr.mxu0 0.0
    %506 = vmatpush1.msra.mxu0 0.0
    %507 = vmatprep.subr.mxu0 0.0
    %508 = vmatpush1.msra.mxu0 0.0
    %509 = vmatprep.subr.mxu0 0.0
    %510 = vmatpush1.msra.mxu0 0.0
    %511 = vmatprep.subr.mxu0 0.0
    %512 = vmatpush1.msra.mxu0 0.0
    %513 = vmatprep.subr.mxu0 0.0
    %514 = vmatpush1.msra.mxu0 0.0
    %515 = vmatprep.subr.mxu0 0.0
    %516 = vmatpush1.msra.mxu0 0.0
    %517 = vmatprep.subr.mxu0 0.0
    %518 = vmatpush1.msra.mxu0 0.0
    %519 = vmatprep.subr.mxu0 0.0
    %520 = vmatpush1.msra.mxu0 0.0
    %521 = vmatprep.subr.mxu0 0.0
    %522 = vmatpush1.msra.mxu0 0.0
    %523 = vmatprep.subr.mxu0 0.0
    %524 = vmatpush1.msra.mxu0 0.0
    %525 = vmatprep.subr.mxu0 0.0
    %526 = vmatpush1.msra.mxu0 0.0
    %527 = vmatprep.subr.mxu0 0.0
    %528 = vmatpush1.msra.mxu0 0.0
    %529 = vmatprep.subr.mxu0 0.0
    %530 = vmatpush1.msra.mxu0 0.0
    %531 = vmatprep.subr.mxu0 0.0
    %532 = vmatpush1.msra.mxu0 0.0
    %533 = vmatprep.subr.mxu0 0.0
    %534 = vmatpush1.msra.mxu0 0.0
    %535 = vmatprep.subr.mxu0 0.0
    %536 = vmatpush1.msra.mxu0 0.0
    %537 = vmatprep.subr.mxu0 0.0
    %538 = vmatpush1.msra.mxu0 0.0
    %539 = vmatprep.subr.mxu0 0.0
    %540 = vmatpush1.msra.mxu0 0.0
    %541 = vmatprep.subr.mxu0 0.0
    %542 = vmatpush1.msra.mxu0 0.0
    %543 = vmatprep.subr.mxu0 0.0
    %544 = vmatpush1.msra.mxu0 0.0
    %545 = vmatprep.subr.mxu0 0.0
    %546 = vmatpush1.msra.mxu0 0.0
    %547 = vmatprep.subr.mxu0 0.0
    %548 = vmatpush1.msra.mxu0 0.0
    %549 = vmatprep.subr.mxu0 0.0
    %550 = vmatpush1.msra.mxu0 0.0
    %551 = vmatprep.subr.mxu0 0.0
    %552 = vmatpush1.msra.mxu0 0.0
    %553 = vmatprep.subr.mxu0 0.0
    %554 = vmatpush1.msra.mxu0 0.0
    %555 = vmatprep.mubr.f32.mxu0 0.0
    %556 = vmatmul.mubr.f32.gmra.mrb[0].mxu0 %v486
    %v557 = vpop.f32.mrb[0].mxu0
    %v558 = vadd.f32 0.0, %v557
    %v559 = vpop.f32.mrb[0].mxu0
    %560 = vmatprep.mubr.f32.mxu0 0.0
    %561 = vmatmul.mubr.f32.gmra.mrb[0].mxu0 %v489
    %v562 = vpop.f32.mrb[0].mxu0
    %v563 = vadd.f32 0.0, %v562
    %v564 = vpop.f32.mrb[0].mxu0
    %565 = vdwg.mxu0
    %v566 = vld [vmem:[#allocation7 + $0x210] sm:$0xff]
    %v567 = vld [vmem:[#allocation7 + $0x218] sm:$0xff]
    %v568 = vld [vmem:[#allocation7 + $0x220] sm:$0xff]
    %v569 = vld [vmem:[#allocation7 + $0x228] sm:$0xff]
    %v570 = vld [vmem:[#allocation7 + $0x230] sm:$0xff]
    %v571 = vld [vmem:[#allocation7 + $0x238] sm:$0xff]
    %v572 = vld [vmem:[#allocation7 + $0x240] sm:$0xff]
    %v573 = vld [vmem:[#allocation7 + $0x248] sm:$0xff]
    %v574 = vld [vmem:[#allocation7 + $0x250] sm:$0xff]
    %v575 = vld [vmem:[#allocation7 + $0x258] sm:$0xff]
    %v576 = vld [vmem:[#allocation7 + $0x260] sm:$0xff]
    %v577 = vld [vmem:[#allocation7 + $0x268] sm:$0xff]
    %v578 = vld [vmem:[#allocation7 + $0x270] sm:$0xff]
    %v579 = vld [vmem:[#allocation7 + $0x278] sm:$0xff]
    %v580 = vld [vmem:[#allocation7 + $0x280] sm:$0xff]
    %v581 = vld [vmem:[#allocation7 + $0x288] sm:$0xff]
    %v582 = vld [vmem:[#allocation7 + $0x290] sm:$0xff]
    %v583 = vld [vmem:[#allocation7 + $0x298] sm:$0xff]
    %v584 = vld [vmem:[#allocation7 + $0x2a0] sm:$0xff]
    %v585 = vld [vmem:[#allocation7 + $0x2a8] sm:$0xff]
    %v586 = vld [vmem:[#allocation7 + $0x2b0] sm:$0xff]
    %v587 = vld [vmem:[#allocation7 + $0x2b8] sm:$0xff]
    %v588 = vld [vmem:[#allocation7 + $0x2c0] sm:$0xff]
    %v589 = vld [vmem:[#allocation7 + $0x2c8] sm:$0xff]
    %v590 = vld [vmem:[#allocation7 + $0x2d0] sm:$0xff]
    %v591 = vld [vmem:[#allocation7 + $0x2d8] sm:$0xff]
    %v592 = vld [vmem:[#allocation7 + $0x2e0] sm:$0xff]
    %v593 = vld [vmem:[#allocation7 + $0x2e8] sm:$0xff]
    %v594 = vld [vmem:[#allocation7 + $0x2f0] sm:$0xff]
    %v595 = vld [vmem:[#allocation7 + $0x2f8] sm:$0xff]
    %v596 = vld [vmem:[#allocation7 + $0x300] sm:$0xff]
    %v597 = vld [vmem:[#allocation7 + $0x308] sm:$0xff]
    %598 = vmatprep.subr.mxu0 0.0
    %599 = vmatpush1.msra.mxu0 %v582
    %600 = vmatprep.subr.mxu0 0.0
    %601 = vmatpush1.msra.mxu0 %v583
    %602 = vmatprep.subr.mxu0 0.0
    %603 = vmatpush1.msra.mxu0 %v584
    %604 = vmatprep.subr.mxu0 0.0
    %605 = vmatpush1.msra.mxu0 %v585
    %606 = vmatprep.subr.mxu0 0.0
    %607 = vmatpush1.msra.mxu0 %v586
    %608 = vmatprep.subr.mxu0 0.0
    %609 = vmatpush1.msra.mxu0 %v587
    %610 = vmatprep.subr.mxu0 0.0
    %611 = vmatpush1.msra.mxu0 %v588
    %612 = vmatprep.subr.mxu0 0.0
    %613 = vmatpush1.msra.mxu0 %v589
    %614 = vmatprep.subr.mxu0 0.0
    %615 = vmatpush1.msra.mxu0 %v590
    %616 = vmatprep.subr.mxu0 0.0
    %617 = vmatpush1.msra.mxu0 %v591
    %618 = vmatprep.subr.mxu0 0.0
    %619 = vmatpush1.msra.mxu0 %v592
    %620 = vmatprep.subr.mxu0 0.0
    %621 = vmatpush1.msra.mxu0 %v593
    %622 = vmatprep.subr.mxu0 0.0
    %623 = vmatpush1.msra.mxu0 %v594
    %624 = vmatprep.subr.mxu0 0.0
    %625 = vmatpush1.msra.mxu0 %v595
    %626 = vmatprep.subr.mxu0 0.0
    %627 = vmatpush1.msra.mxu0 %v596
    %628 = vmatprep.subr.mxu0 0.0
    %629 = vmatpush1.msra.mxu0 %v597
    %630 = vmatprep.subr.mxu0 0.0
    %631 = vmatpush1.msra.mxu0 0.0
    %632 = vmatprep.subr.mxu0 0.0
    %633 = vmatpush1.msra.mxu0 0.0
    %634 = vmatprep.subr.mxu0 0.0
    %635 = vmatpush1.msra.mxu0 0.0
    %636 = vmatprep.subr.mxu0 0.0
    %637 = vmatpush1.msra.mxu0 0.0
    %638 = vmatprep.subr.mxu0 0.0
    %639 = vmatpush1.msra.mxu0 0.0
    %640 = vmatprep.subr.mxu0 0.0
    %641 = vmatpush1.msra.mxu0 0.0
    %642 = vmatprep.subr.mxu0 0.0
    %643 = vmatpush1.msra.mxu0 0.0
    %644 = vmatprep.subr.mxu0 0.0
    %645 = vmatpush1.msra.mxu0 0.0
    %646 = vmatprep.subr.mxu0 0.0
    %647 = vmatpush1.msra.mxu0 0.0
    %648 = vmatprep.subr.mxu0 0.0
    %649 = vmatpush1.msra.mxu0 0.0
    %650 = vmatprep.subr.mxu0 0.0
    %651 = vmatpush1.msra.mxu0 0.0
    %652 = vmatprep.subr.mxu0 0.0
    %653 = vmatpush1.msra.mxu0 0.0
    %654 = vmatprep.subr.mxu0 0.0
    %655 = vmatpush1.msra.mxu0 0.0
    %656 = vmatprep.subr.mxu0 0.0
    %657 = vmatpush1.msra.mxu0 0.0
    %658 = vmatprep.subr.mxu0 0.0
    %659 = vmatpush1.msra.mxu0 0.0
    %660 = vmatprep.subr.mxu0 0.0
    %661 = vmatpush1.msra.mxu0 0.0
    %662 = vmatprep.mubr.f32.mxu0 0.0
    %663 = vmatmul.mubr.f32.gmra.mrb[0].mxu0 %v563
    %v664 = vpop.f32.mrb[0].mxu0
    %v665 = vadd.f32 0.0, %v664
    %v666 = vpop.f32.mrb[0].mxu0
    %667 = vdwg.mxu0
    %668 = vmatprep.subr.mxu0 0.0
    %669 = vmatpush1.msra.mxu0 %v566
    %670 = vmatprep.subr.mxu0 0.0
    %671 = vmatpush1.msra.mxu0 %v567
    %672 = vmatprep.subr.mxu0 0.0
    %673 = vmatpush1.msra.mxu0 %v568
    %674 = vmatprep.subr.mxu0 0.0
    %675 = vmatpush1.msra.mxu0 %v569
    %676 = vmatprep.subr.mxu0 0.0
    %677 = vmatpush1.msra.mxu0 %v570
    %678 = vmatprep.subr.mxu0 0.0
    %679 = vmatpush1.msra.mxu0 %v571
    %680 = vmatprep.subr.mxu0 0.0
    %681 = vmatpush1.msra.mxu0 %v572
    %682 = vmatprep.subr.mxu0 0.0
    %683 = vmatpush1.msra.mxu0 %v573
    %684 = vmatprep.subr.mxu0 0.0
    %685 = vmatpush1.msra.mxu0 %v574
    %686 = vmatprep.subr.mxu0 0.0
    %687 = vmatpush1.msra.mxu0 %v575
    %688 = vmatprep.subr.mxu0 0.0
    %689 = vmatpush1.msra.mxu0 %v576
    %690 = vmatprep.subr.mxu0 0.0
    %691 = vmatpush1.msra.mxu0 %v577
    %692 = vmatprep.subr.mxu0 0.0
    %693 = vmatpush1.msra.mxu0 %v578
    %694 = vmatprep.subr.mxu0 0.0
    %695 = vmatpush1.msra.mxu0 %v579
    %696 = vmatprep.subr.mxu0 0.0
    %697 = vmatpush1.msra.mxu0 %v580
    %698 = vmatprep.subr.mxu0 0.0
    %699 = vmatpush1.msra.mxu0 %v581
    %700 = vmatprep.subr.mxu0 0.0
    %701 = vmatpush1.msra.mxu0 0.0
    %702 = vmatprep.subr.mxu0 0.0
    %703 = vmatpush1.msra.mxu0 0.0
    %704 = vmatprep.subr.mxu0 0.0
    %705 = vmatpush1.msra.mxu0 0.0
    %706 = vmatprep.subr.mxu0 0.0
    %707 = vmatpush1.msra.mxu0 0.0
    %708 = vmatprep.subr.mxu0 0.0
    %709 = vmatpush1.msra.mxu0 0.0
    %710 = vmatprep.subr.mxu0 0.0
    %711 = vmatpush1.msra.mxu0 0.0
    %712 = vmatprep.subr.mxu0 0.0
    %713 = vmatpush1.msra.mxu0 0.0
    %714 = vmatprep.subr.mxu0 0.0
    %715 = vmatpush1.msra.mxu0 0.0
    %716 = vmatprep.subr.mxu0 0.0
    %717 = vmatpush1.msra.mxu0 0.0
    %718 = vmatprep.subr.mxu0 0.0
    %719 = vmatpush1.msra.mxu0 0.0
    %720 = vmatprep.subr.mxu0 0.0
    %721 = vmatpush1.msra.mxu0 0.0
    %722 = vmatprep.subr.mxu0 0.0
    %723 = vmatpush1.msra.mxu0 0.0
    %724 = vmatprep.subr.mxu0 0.0
    %725 = vmatpush1.msra.mxu0 0.0
    %726 = vmatprep.subr.mxu0 0.0
    %727 = vmatpush1.msra.mxu0 0.0
    %728 = vmatprep.subr.mxu0 0.0
    %729 = vmatpush1.msra.mxu0 0.0
    %730 = vmatprep.subr.mxu0 0.0
    %731 = vmatpush1.msra.mxu0 0.0
    %732 = vmatprep.mubr.f32.mxu0 0.0
    %733 = vmatmul.mubr.f32.gmra.mrb[0].mxu0 %v558
    %v734 = vpop.f32.mrb[0].mxu0
    %v735 = vadd.f32 %v665, %v734
    %v736 = vpop.f32.mrb[0].mxu0
    %737 = vdwg.mxu0
    %v738 = vld [vmem:[#allocation7 + $0x310] sm:$0xff]
    %v739 = vlaneseq
    %v740 = vshrl.u32 %v739, 7
    %v741 = vsub.s32 0, %v740
    %v742 = vrot.slane %v738, %v741
    %v743 = vadd.f32 %v735, %v742
    %v744 = vmax.f32 %v743, 0.0
    %v745 = vld [vmem:[#allocation7 + $0x318] sm:$0xff]
    %v746 = vld [vmem:[#allocation7 + $0x320] sm:$0xff]
    %v747 = vlaneseq
    %v748 = vshrl.u32 %v747, 7
    %v749 = vsub.s32 0, %v748
    %v750 = vrot.slane %v745, %v749
    %v751 = vmul.f32 %v744, %v750
    %752 = vadd.xlane.f32.xlu0 %v751
    %v753 = vpop.xlane.xlu0 %752
    %v754 = vlaneseq
    %v755 = vshrl.u32 %v754, 7
    %v756 = vsub.s32 0, %v755
    %v757 = vrot.slane %v746, %v756
    %v758 = vadd.f32 %v753, %v757
    %760 = vset.pattern.permute.xlu0 0
    %761 = vperm.xlu0 %760, %v758
    %v762 = vpop.permute.xlu0 %761
    %764 = vst [vmem:[#allocation8] sm:$0xff] %v762
    // Predicated region
    $region26: #{tpu_custom_call.1} parent=1 // pred_check
      _
    $region27: #{tpu_custom_call.1} parent=1 // pred_check_branch
      %766 = sbr.rel (0) target = $region29
    $region28: #{tpu_custom_call.1} parent=1 // pred_region
      %s768 = ssub.s32 128, 128
      %769 = vsyncadd [#allocation4], %s768
      %s771 = sshll.u32 [#allocation8], 4
      %s772 = int_to_ptr.vmem [resolvable:$true] %s771
      %774 = dma.vmem_to_hbm [thread:$0]  %s772, 128, %s3, [#allocation4]
    $region29: #{tpu_custom_call.1} parent=1 // pred_fallthru
      _
    // Predicated region
    $region30: #{tpu_custom_call.1} parent=1 // pred_check
      _
    $region31: #{tpu_custom_call.1} parent=1 // pred_check_branch
      %776 = sbr.rel (0) target = $region33
    $region32: #{tpu_custom_call.1} parent=1 // pred_region
      %777 = dma.done [#allocation4], 128
    $region33: #{tpu_custom_call.1} parent=1 // pred_fallthru
      _
    %778 = vsyncpa [#allocation3], 1
    %779 = vsyncpa [#allocation6], 1
    %780 = vsyncpa [#allocation4], 1

</llo_original>
